<compile_context>
chip_gen: v7x
topology: tpu7x:2x2x1
jax: 0.10.0
libtpu: 0.0.40
codegen_flags: <defaults>
</compile_context>

<pallas_src>
import functools
import math

import jax
import jax.numpy as jnp
from jax.experimental import pallas as pl
from jax.experimental.pallas import tpu as pltpu

# ----------------------- module configuration (small, consistent with __init__) ----------
DIM = 64                  # dim
NUM_HEADS = 2             # num_attention_heads
HEAD_DIM = 32             # attention_head_dim  (inner_dim = 2*32 = 64 = dim)
NUM_ROUTED_EXPERTS = 4
NUM_ACTIVATED_EXPERTS = 2
LN_EPS = 1e-6
RMS_EPS = 1e-5            # HiDreamAttention default eps for q/k RMSNorm


def _swiglu_hidden(hidden_dim, multiple_of=256):
    # FeedForwardSwiGLU hidden-dim rule from the reference
    hidden_dim = int(2 * hidden_dim / 3)
    return multiple_of * ((hidden_dim + multiple_of - 1) // multiple_of)


# ----------------------------------- Pallas kernels --------------------------------------
def _ada_kernel(x_ref, w_ref, b_ref, o_ref):
    # adaLN_modulation = SiLU -> Linear (fused).
    x = x_ref[...].astype(jnp.float32)
    x = x * jax.nn.sigmoid(x)
    y = jax.lax.dot_general(x.astype(jnp.bfloat16), w_ref[...].astype(jnp.bfloat16),
                            (((1,), (1,)), ((), ())),
                            preferred_element_type=jnp.float32)
    o_ref[...] = (y + b_ref[...].astype(jnp.float32)).astype(o_ref.dtype)


def ada_linear(x, w, b):
    M = x.shape[0]
    N = w.shape[0]
    return pl.pallas_call(
        _ada_kernel,
        out_shape=jax.ShapeDtypeStruct((M, N), x.dtype),
    )(x, w, b.reshape(1, -1))


def _ln_qkv_rope_kernel(tok_ref, scale_ref, shift_ref, w_ref, b_ref, qrms_ref, krms_ref,
                        cos_ref, sin_ref, q_ref, k_ref, v_ref, *,
                        heads, head_dim, ln_eps, rms_eps):
    """LayerNorm + adaLN modulation + fused QKV matmul + q/k RMSNorm + RoPE, one batch."""
    f32 = jnp.float32
    inner = heads * head_dim

    x = tok_ref[0].astype(f32)                                  # (S, D)
    mean = jnp.mean(x, axis=-1, keepdims=True)
    var = jnp.mean(jnp.square(x - mean), axis=-1, keepdims=True)
    xn = (x - mean) * jax.lax.rsqrt(var + ln_eps)
    xn = xn * (1.0 + scale_ref[0].astype(f32)) + shift_ref[0].astype(f32)

    qkv = jax.lax.dot_general(xn.astype(jnp.bfloat16), w_ref[...].astype(jnp.bfloat16),
                              (((1,), (1,)), ((), ())),
                              preferred_element_type=f32)        # (S, 3*inner)
    qkv = qkv + b_ref[...].astype(f32)

    q = qkv[:, :inner]
    k = qkv[:, inner:2 * inner]
    v = qkv[:, 2 * inner:]

    # RMSNorm(inner_dim, eps) on q and k.
    q = q * jax.lax.rsqrt(jnp.mean(q * q, axis=-1, keepdims=True) + rms_eps) \
          * qrms_ref[...].astype(f32)
    k = k * jax.lax.rsqrt(jnp.mean(k * k, axis=-1, keepdims=True) + rms_eps) \
          * krms_ref[...].astype(f32)

    # RoPE (interleaved even/odd pairs).  The signed pair swap is implemented as a matmul
    # with a constant +-1 permutation matrix (MXU is idle during this VPU phase).
    cos = cos_ref[0].astype(f32)                                 # (S, inner)
    sin = sin_ref[0].astype(f32)
    jj = jax.lax.broadcasted_iota(jnp.int32, (inner, inner), 0)
    dd = jax.lax.broadcasted_iota(jnp.int32, (inner, inner), 1)
    swap_mat = (jnp.where((jj == dd + 1) & (dd % 2 == 0), -1.0, 0.0)
                + jnp.where((jj + 1 == dd) & (dd % 2 == 1), 1.0, 0.0)).astype(f32)

    def rope_rot(t):
        swapped = jax.lax.dot_general(t, swap_mat, (((1,), (0,)), ((), ())),
                                      preferred_element_type=f32)
        return cos * t + sin * swapped

    q = rope_rot(q)
    k = rope_rot(k)

    # Write q/k/v directly in (head-major) attention layout -> no HBM transpose later.
    for h in range(heads):
        sl = slice(h * head_dim, (h + 1) * head_dim)
        q_ref[0, h] = q[:, sl].astype(q_ref.dtype)
        k_ref[0, h] = k[:, sl].astype(k_ref.dtype)
        v_ref[0, h] = v[:, sl].astype(v_ref.dtype)


def fused_ln_qkv_rope(tokens, scale, shift, wqkv, bqkv, qrms, krms, cos, sin):
    B, S, D = tokens.shape
    H, Dh = NUM_HEADS, HEAD_DIM
    inner = H * Dh
    qkv_dim = wqkv.shape[0]
    out_sd = jax.ShapeDtypeStruct((B, H, S, Dh), tokens.dtype)

    full2 = lambda b: (0, 0)
    tok_spec = pl.BlockSpec((1, S, D), lambda b: (b, 0, 0))
    mod_spec = pl.BlockSpec((1, 1, D), lambda b: (b, 0, 0))
    rope_spec = pl.BlockSpec((1, S, inner), lambda b: (b, 0, 0))
    out_spec = pl.BlockSpec((1, H, S, Dh), lambda b: (b, 0, 0, 0))

    return pl.pallas_call(
        functools.partial(_ln_qkv_rope_kernel, heads=H, head_dim=Dh,
                          ln_eps=LN_EPS, rms_eps=RMS_EPS),
        grid=(B,),
        in_specs=[tok_spec, mod_spec, mod_spec,
                  pl.BlockSpec((qkv_dim, D), full2),
                  pl.BlockSpec((1, qkv_dim), full2),
                  pl.BlockSpec((1, inner), full2),
                  pl.BlockSpec((1, inner), full2),
                  rope_spec, rope_spec],
        out_specs=(out_spec, out_spec, out_spec),
        out_shape=(out_sd, out_sd, out_sd),
        compiler_params=pltpu.CompilerParams(dimension_semantics=("parallel",)),
    )(tokens, scale, shift, wqkv, bqkv.reshape(1, -1),
      qrms.reshape(1, -1), krms.reshape(1, -1), cos, sin)


def _attn_kernel(qi_ref, ki_ref, vi_ref, qt_ref, kt_ref, vt_ref, oi_ref, ot_ref, *, scale):
    """Exact softmax attention over the concatenated (image+text) keys, computed as a
    two-block softmax so no seq concat / transpose ever hits HBM or VMEM copies."""
    bf16 = jnp.bfloat16

    def flat(ref):
        x = ref[...]
        b, h, s, d = x.shape
        return x.reshape(b * h, s, d).astype(bf16)

    qi, ki, vi = flat(qi_ref), flat(ki_ref), flat(vi_ref)
    qt, kt, vt = flat(qt_ref), flat(kt_ref), flat(vt_ref)

    def attend(q):
        s_i = jnp.einsum('bqd,bkd->bqk', q, ki, preferred_element_type=jnp.float32) * scale
        s_t = jnp.einsum('bqd,bkd->bqk', q, kt, preferred_element_type=jnp.float32) * scale
        m = jnp.maximum(jnp.max(s_i, axis=-1, keepdims=True),
                        jnp.max(s_t, axis=-1, keepdims=True))
        p_i = jnp.exp(s_i - m)
        p_t = jnp.exp(s_t - m)
        denom = (jnp.sum(p_i, axis=-1, keepdims=True)
                 + jnp.sum(p_t, axis=-1, keepdims=True))
        inv = pl.reciprocal(denom, approx=True)
        o = (jnp.einsum('bqk,bkd->bqd', p_i.astype(bf16), vi,
                        preferred_element_type=jnp.float32)
             + jnp.einsum('bqk,bkd->bqd', p_t.astype(bf16), vt,
                          preferred_element_type=jnp.float32))
        return o * inv

    b, h, s_img, d = qi_ref.shape
    s_txt = qt_ref.shape[2]
    oi_ref[...] = attend(qi).reshape(b, h, s_img, d).astype(oi_ref.dtype)
    ot_ref[...] = attend(qt).reshape(b, h, s_txt, d).astype(ot_ref.dtype)


def attention(q_i, k_i, v_i, q_t, k_t, v_t):
    # TODO(synk): at production sequence lengths convert to a flash-style online-softmax
    # with a KV grid axis ("arbitrary") so the score matrix never materialises
    # (required to fit v7x's 64 MiB VMEM).
    Dh = q_i.shape[-1]
    return pl.pallas_call(
        functools.partial(_attn_kernel, scale=1.0 / math.sqrt(Dh)),
        out_shape=(jax.ShapeDtypeStruct(q_i.shape, q_i.dtype),
                   jax.ShapeDtypeStruct(q_t.shape, q_t.dtype)),
    )(q_i, k_i, v_i, q_t, k_t, v_t)


def _out_proj_residual_kernel(o_ref, w_ref, b_ref, gate_ref, res_ref, out_ref, *,
                              heads, head_dim):
    """to_out projection consumed per-head (no head-merge transpose) + gated residual."""
    f32 = jnp.float32
    bf16 = jnp.bfloat16
    w = w_ref[...].astype(bf16)                                  # (D, inner)
    acc = None
    for h in range(heads):
        oh = o_ref[0, h].astype(bf16)                            # (S, Dh)
        wh = w[:, h * head_dim:(h + 1) * head_dim]               # (D, Dh)
        yh = jax.lax.dot_general(oh, wh, (((1,), (1,)), ((), ())),
                                 preferred_element_type=f32)
        acc = yh if acc is None else acc + yh
    y = acc + b_ref[...].astype(f32)
    out = gate_ref[0].astype(f32) * y + res_ref[0].astype(f32)
    out_ref[0] = out.astype(out_ref.dtype)


def out_proj_residual(o, w, b, gate, res):
    B, H, S, Dh = o.shape
    D = w.shape[0]
    full2 = lambda i: (0, 0)
    return pl.pallas_call(
        functools.partial(_out_proj_residual_kernel, heads=H, head_dim=Dh),
        grid=(B,),
        in_specs=[pl.BlockSpec((1, H, S, Dh), lambda i: (i, 0, 0, 0)),
                  pl.BlockSpec((D, H * Dh), full2),
                  pl.BlockSpec((1, D), full2),
                  pl.BlockSpec((1, 1, D), lambda i: (i, 0, 0)),
                  pl.BlockSpec((1, S, D), lambda i: (i, 0, 0))],
        out_specs=pl.BlockSpec((1, S, D), lambda i: (i, 0, 0)),
        out_shape=jax.ShapeDtypeStruct(res.shape, res.dtype),
        compiler_params=pltpu.CompilerParams(dimension_semantics=("parallel",)),
    )(o, w, b.reshape(1, -1), gate, res)


def _ln_swiglu_residual_kernel(tok_ref, scale_ref, shift_ref, gate_ref,
                               w1_ref, w3_ref, w2_ref, out_ref, *, eps):
    """LayerNorm + modulation + SwiGLU FF + gated residual, one batch."""
    f32 = jnp.float32
    bf16 = jnp.bfloat16
    x = tok_ref[0].astype(f32)
    mean = jnp.mean(x, axis=-1, keepdims=True)
    var = jnp.mean(jnp.square(x - mean), axis=-1, keepdims=True)
    xn = (x - mean) * jax.lax.rsqrt(var + eps)
    xn = xn * (1.0 + scale_ref[0].astype(f32)) + shift_ref[0].astype(f32)
    xb = xn.astype(bf16)
    dims = (((1,), (1,)), ((), ()))
    h1 = jax.lax.dot_general(xb, w1_ref[...].astype(bf16), dims, preferred_element_type=f32)
    h3 = jax.lax.dot_general(xb, w3_ref[...].astype(bf16), dims, preferred_element_type=f32)
    hsw = (h1 * jax.nn.sigmoid(h1)) * h3
    y = jax.lax.dot_general(hsw.astype(bf16), w2_ref[...].astype(bf16), dims,
                            preferred_element_type=f32)
    out = gate_ref[0].astype(f32) * y + x
    out_ref[0] = out.astype(out_ref.dtype)


def ln_swiglu_residual(tokens, scale, shift, gate, ffp):
    # TODO(synk): at production dim (~2560) this needs M/N/K BlockSpec tiling with a VMEM
    # accumulator (256-multiple tiles for v6e/v7x MXU); at this toy size one block per
    # batch is the whole matrix.
    B, S, D = tokens.shape
    hdim = ffp['w1'].shape[0]
    full2 = lambda i: (0, 0)
    mod_spec = pl.BlockSpec((1, 1, D), lambda i: (i, 0, 0))
    return pl.pallas_call(
        functools.partial(_ln_swiglu_residual_kernel, eps=LN_EPS),
        grid=(B,),
        in_specs=[pl.BlockSpec((1, S, D), lambda i: (i, 0, 0)),
                  mod_spec, mod_spec, mod_spec,
                  pl.BlockSpec((hdim, D), full2),
                  pl.BlockSpec((hdim, D), full2),
                  pl.BlockSpec((D, hdim), full2)],
        out_specs=pl.BlockSpec((1, S, D), lambda i: (i, 0, 0)),
        out_shape=jax.ShapeDtypeStruct(tokens.shape, tokens.dtype),
        compiler_params=pltpu.CompilerParams(dimension_semantics=("parallel",)),
    )(tokens, scale, shift, gate, ffp['w1'], ffp['w3'], ffp['w2'])


def _moe_kernel(tok_ref, scale_ref, shift_ref, gate_ref, dw_ref,
                w1_ref, w3_ref, w2_ref, out_ref, xn_ref, acc_ref, *, eps):
    """Single-call MoE: grid over (routed experts + shared expert), resident output.
    e==0 computes LayerNorm+modulation once into scratch; every step accumulates
    weight[e] * SwiGLU_e(xn); last step applies gate and the residual."""
    f32 = jnp.float32
    bf16 = jnp.bfloat16
    e = pl.program_id(0)
    n_e = pl.num_programs(0)

    @pl.when(e == 0)
    def _():
        x = tok_ref[...].astype(f32)                              # (N, D)
        mean = jnp.mean(x, axis=-1, keepdims=True)
        var = jnp.mean(jnp.square(x - mean), axis=-1, keepdims=True)
        xn = (x - mean) * jax.lax.rsqrt(var + eps)
        xn = xn * (1.0 + scale_ref[...].astype(f32)) + shift_ref[...].astype(f32)
        xn_ref[...] = xn.astype(xn_ref.dtype)
        acc_ref[...] = jnp.zeros_like(acc_ref)

    xb = xn_ref[...]                                              # (N, D) bf16
    dims = (((1,), (1,)), ((), ()))
    h1 = jax.lax.dot_general(xb, w1_ref[0].astype(bf16), dims, preferred_element_type=f32)
    h3 = jax.lax.dot_general(xb, w3_ref[0].astype(bf16), dims, preferred_element_type=f32)
    hsw = (h1 * jax.nn.sigmoid(h1)) * h3
    y = jax.lax.dot_general(hsw.astype(bf16), w2_ref[0].astype(bf16), dims,
                            preferred_element_type=f32)
    acc_ref[...] += dw_ref[0].astype(f32) * y

    @pl.when(e == n_e - 1)
    def _():
        x = tok_ref[...].astype(f32)
        out = gate_ref[...].astype(f32) * acc_ref[...] + x
        out_ref[...] = out.astype(out_ref.dtype)


def moe_ff_fused(tok_flat, scale_flat, shift_flat, gate_flat, dense_w, w1_s, w3_s, w2_s):
    # TODO(synk): the reference does sparse top-k token dispatch (moe_infer argsort/scatter);
    # here every token runs through every routed expert with zero routing weight for
    # unselected experts (numerically identical, ~2.5x FLOPs) in a single pallas_call.
    N, D = tok_flat.shape
    E1, hdim, _ = w1_s.shape
    full2 = lambda e: (0, 0)
    expert3 = lambda e: (e, 0, 0)
    return pl.pallas_call(
        functools.partial(_moe_kernel, eps=LN_EPS),
        grid=(E1,),
        in_specs=[pl.BlockSpec((N, D), full2),
                  pl.BlockSpec((N, D), full2),
                  pl.BlockSpec((N, D), full2),
                  pl.BlockSpec((N, D), full2),
                  pl.BlockSpec((1, N, 1), expert3),
                  pl.BlockSpec((1, hdim, D), expert3),
                  pl.BlockSpec((1, hdim, D), expert3),
                  pl.BlockSpec((1, D, hdim), expert3)],
        out_specs=pl.BlockSpec((N, D), full2),
        out_shape=jax.ShapeDtypeStruct((N, D), tok_flat.dtype),
        scratch_shapes=[pltpu.VMEM((N, D), jnp.bfloat16),
                        pltpu.VMEM((N, D), jnp.float32)],
        compiler_params=pltpu.CompilerParams(dimension_semantics=("arbitrary",)),
    )(tok_flat, scale_flat, shift_flat, gate_flat, dense_w, w1_s, w3_s, w2_s)


# ----------------------------------- JAX glue ---------------------------------------------
def build_rope(batch, seq, head_dim, theta=10000.0):
    # Matches the reference rope(): (B, S, 1, head_dim//2, 2, 2) rotation matrices.
    pos = jnp.broadcast_to(jnp.arange(seq, dtype=jnp.float32), (batch, seq))
    scale = jnp.arange(0, head_dim, 2, dtype=jnp.float32) / head_dim
    omega = 1.0 / (theta ** scale)
    ang = pos[..., None] * omega                              # (B, S, head_dim//2)
    cos, sin = jnp.cos(ang), jnp.sin(ang)
    mat = jnp.stack([cos, -sin, sin, cos], axis=-1).reshape(batch, seq, head_dim // 2, 2, 2)
    return mat[:, :, None]                                    # (B, S, 1, head_dim//2, 2, 2)


def rope_lane_cos_sin(rope, heads):
    # rope rotation matrices -> per-lane cos/sin of shape (B, S, heads*head_dim)
    cos_h = rope[:, :, 0, :, 0, 0]                            # (B, S, Dh//2)
    sin_h = rope[:, :, 0, :, 1, 0]
    cos = jnp.tile(jnp.repeat(cos_h, 2, axis=-1), (1, 1, heads))
    sin = jnp.tile(jnp.repeat(sin_h, 2, axis=-1), (1, 1, heads))
    return cos, sin


def _ln_mod_jnp(x, scale, shift, eps=LN_EPS):
    # tiny duplicate LN used only to feed the MoE router logits (lane-skinny, left to XLA)
    xf = x.astype(jnp.float32)
    mean = xf.mean(-1, keepdims=True)
    var = jnp.square(xf - mean).mean(-1, keepdims=True)
    xn = (xf - mean) * jax.lax.rsqrt(var + eps)
    return xn * (1.0 + scale.astype(jnp.float32)) + shift.astype(jnp.float32)


def hidream_image_block_forward(params, image_tokens, text_tokens, adaln_input,
                                rope, image_tokens_masks=None):
    B, S_i, dim = image_tokens.shape
    S_t = text_tokens.shape[1]
    H, Dh = NUM_HEADS, HEAD_DIM
    att = params['attn']

    # adaLN_modulation(adaln_input)[:, None].chunk(12, dim=-1)
    ada = ada_linear(adaln_input, params['ada_w'], params['ada_b'])[:, None, :]
    (shift_msa_i, scale_msa_i, gate_msa_i, shift_mlp_i, scale_mlp_i, gate_mlp_i,
     shift_msa_t, scale_msa_t, gate_msa_t, shift_mlp_t, scale_mlp_t, gate_mlp_t
     ) = jnp.split(ada, 12, axis=-1)

    cos, sin = rope_lane_cos_sin(rope, H)

    # Fused QKV weights (N = 3*inner, lane-dense) with the q/k RMSNorm + RoPE in-kernel.
    wqkv_i = jnp.concatenate([att['to_q_w'], att['to_k_w'], att['to_v_w']], axis=0)
    bqkv_i = jnp.concatenate([att['to_q_b'], att['to_k_b'], att['to_v_b']], axis=0)
    wqkv_t = jnp.concatenate([att['to_q_t_w'], att['to_k_t_w'], att['to_v_t_w']], axis=0)
    bqkv_t = jnp.concatenate([att['to_q_t_b'], att['to_k_t_b'], att['to_v_t_b']], axis=0)

    q_i, k_i, v_i = fused_ln_qkv_rope(image_tokens, scale_msa_i, shift_msa_i,
                                      wqkv_i, bqkv_i, att['q_rms_w'], att['k_rms_w'],
                                      cos[:, :S_i], sin[:, :S_i])
    q_t, k_t, v_t = fused_ln_qkv_rope(text_tokens, scale_msa_t, shift_msa_t,
                                      wqkv_t, bqkv_t, att['q_rms_t_w'], att['k_rms_t_w'],
                                      cos[:, S_i:], sin[:, S_i:])

    if image_tokens_masks is not None:
        # Reference multiplies key_i by the mask (before RoPE; the per-position scalar
        # commutes with the per-position RoPE rotation, so applying it here is identical).
        k_i = k_i * image_tokens_masks.reshape(B, 1, S_i, 1).astype(k_i.dtype)

    o_i, o_t = attention(q_i, k_i, v_i, q_t, k_t, v_t)          # (B, H, S_x, Dh)

    image_tokens = out_proj_residual(o_i, att['to_out_w'], att['to_out_b'],
                                     gate_msa_i, image_tokens)
    text_tokens = out_proj_residual(o_t, att['to_out_t_w'], att['to_out_t_b'],
                                    gate_msa_t, text_tokens)

    # ---------------- image-stream MoE feed-forward ----------------
    ffp = params['ff_i']
    E = len(ffp['experts'])
    N = B * S_i

    # Router (MoEGate): softmax logits on the normalized+modulated tokens, top-k (no renorm).
    xn_gate = _ln_mod_jnp(image_tokens, scale_mlp_i, shift_mlp_i).reshape(N, dim)
    logits = xn_gate @ ffp['gate_w'].T.astype(jnp.float32)
    scores = jax.nn.softmax(logits, axis=-1)
    topk_w, topk_idx = jax.lax.top_k(scores, NUM_ACTIVATED_EXPERTS)
    onehot = jax.nn.one_hot(topk_idx, E, dtype=jnp.float32)
    routed_w = jnp.einsum('nk,nke->ne', topk_w, onehot)          # 0 for unselected experts
    dense_w = jnp.concatenate([routed_w, jnp.ones((N, 1), jnp.float32)], axis=-1)
    dense_w = jnp.transpose(dense_w)[:, :, None]                 # (E+1, N, 1), shared = 1.0

    # Stack (and exactly zero-pad, if needed) routed + shared expert weights.
    experts = list(ffp['experts']) + [ffp['shared']]
    h_max = max(p['w1'].shape[0] for p in experts)

    def pad_h(p):
        pad = h_max - p['w1'].shape[0]
        if pad == 0:
            return p['w1'], p['w3'], p['w2']
        return (jnp.pad(p['w1'], ((0, pad), (0, 0))),
                jnp.pad(p['w3'], ((0, pad), (0, 0))),
                jnp.pad(p['w2'], ((0, 0), (0, pad))))

    padded = [pad_h(p) for p in experts]
    w1_s = jnp.stack([t[0] for t in padded])
    w3_s = jnp.stack([t[1] for t in padded])
    w2_s = jnp.stack([t[2] for t in padded])

    tok_flat = image_tokens.reshape(N, dim)
    scale_flat = jnp.broadcast_to(scale_mlp_i, (B, S_i, dim)).reshape(N, dim)
    shift_flat = jnp.broadcast_to(shift_mlp_i, (B, S_i, dim)).reshape(N, dim)
    gate_flat = jnp.broadcast_to(gate_mlp_i, (B, S_i, dim)).reshape(N, dim)

    image_tokens = moe_ff_fused(tok_flat, scale_flat, shift_flat, gate_flat,
                                dense_w, w1_s, w3_s, w2_s).reshape(B, S_i, dim)

    # ---------------- text-stream SwiGLU feed-forward ----------------
    text_tokens = ln_swiglu_residual(text_tokens, scale_mlp_t, shift_mlp_t, gate_mlp_t,
                                     params['ff_t'])
    return image_tokens, text_tokens


# ----------------------------------- parameter init ---------------------------------------
def init_params(key, dim=DIM, heads=NUM_HEADS, head_dim=HEAD_DIM, num_routed=NUM_ROUTED_EXPERTS):
    inner = heads * head_dim
    keys = iter(jax.random.split(key, 128))

    def w(shape, scale=0.02):
        return scale * jax.random.normal(next(keys), shape, jnp.float32)

    params = {}
    # NOTE: the reference zero-inits adaLN_modulation (which would make the block an
    # identity map); we use small random values so the kernels are actually exercised.
    params['ada_w'] = w((12 * dim, dim))
    params['ada_b'] = w((12 * dim,))

    att = {}
    for name, shp in [('to_q', (inner, dim)), ('to_k', (inner, inner)),
                      ('to_v', (inner, inner)), ('to_out', (dim, inner)),
                      ('to_q_t', (inner, dim)), ('to_k_t', (inner, inner)),
                      ('to_v_t', (inner, inner)), ('to_out_t', (dim, inner))]:
        att[name + '_w'] = w(shp)
        att[name + '_b'] = w((shp[0],))
    for name in ['q_rms_w', 'k_rms_w', 'q_rms_t_w', 'k_rms_t_w']:
        att[name] = jnp.ones((inner,), jnp.float32)
    params['attn'] = att

    def ff_params(hidden_param):
        h = _swiglu_hidden(hidden_param)
        return {'w1': w((h, dim)), 'w2': w((dim, h)), 'w3': w((h, dim))}

    params['ff_i'] = {
        'shared': ff_params((4 * dim) // 2),
        'experts': [ff_params(4 * dim) for _ in range(num_routed)],
        'gate_w': w((num_routed, dim)),
    }
    params['ff_t'] = ff_params(4 * dim)
    return params


# ----------------------------------- main --------------------------------------------------
if __name__ == "__main__":
    B, S_IMG, S_TXT = 2, 16, 8
    key = jax.random.PRNGKey(0)
    kp, ki, kt, ka = jax.random.split(key, 4)

    params = init_params(kp)
    image_tokens = jax.random.normal(ki, (B, S_IMG, DIM), jnp.float32)
    text_tokens = jax.random.normal(kt, (B, S_TXT, DIM), jnp.float32)
    adaln_input = jax.random.normal(ka, (B, DIM), jnp.float32)
    rope = build_rope(B, S_IMG + S_TXT, HEAD_DIM)

    img_out, txt_out = hidream_image_block_forward(
        params, image_tokens, text_tokens, adaln_input, rope, image_tokens_masks=None)
    jax.block_until_ready((img_out, txt_out))

    assert img_out.shape == (B, S_IMG, DIM)
    assert txt_out.shape == (B, S_TXT, DIM)
    assert jnp.all(jnp.isfinite(img_out)) and jnp.all(jnp.isfinite(txt_out))
    print("KERNEL_OK")
</pallas_src>

<mosaic_0001>
module attributes {stable_mosaic.version = 11 : i64} {
  func.func @_ada_kernel(%arg0: memref<2x64xf32, #tpu.memory_space<vmem>>, %arg1: memref<768x64xf32, #tpu.memory_space<vmem>>, %arg2: memref<1x768xf32, #tpu.memory_space<vmem>>, %arg3: memref<2x768xf32, #tpu.memory_space<vmem>>) attributes {dimension_semantics = [], scalar_prefetch = 0 : i64, scratch_operands = 0 : i64, tpu.core_type = #tpu.core_type<tc>} {
    %c0 = arith.constant 0 : index
    %c0_0 = arith.constant 0 : index
    %0 = vector.load %arg0[%c0, %c0_0] : memref<2x64xf32, #tpu.memory_space<vmem>>, vector<2x64xf32>
    %1 = arith.negf %0 : vector<2x64xf32>
    %2 = math.exp %1 : vector<2x64xf32>
    %cst = arith.constant 1.000000e+00 : f32
    %3 = vector.broadcast %cst : f32 to vector<2x64xf32>
    %4 = arith.addf %3, %2 : vector<2x64xf32>
    %5 = arith.divf %3, %4 : vector<2x64xf32>
    %6 = arith.mulf %0, %5 : vector<2x64xf32>
    %7 = arith.truncf %6 : vector<2x64xf32> to vector<2x64xbf16>
    %c0_1 = arith.constant 0 : index
    %c0_2 = arith.constant 0 : index
    %8 = vector.load %arg1[%c0_1, %c0_2] : memref<768x64xf32, #tpu.memory_space<vmem>>, vector<768x64xf32>
    %9 = arith.truncf %8 : vector<768x64xf32> to vector<768x64xbf16>
    %cst_3 = arith.constant dense<0.000000e+00> : vector<2x768xf32>
    %10 = tpu.matmul %7, %9, %cst_3 {dimension_numbers = #tpu.dot_dimension_numbers<[1], [1], [0], [0], [0, 0, 1, 0], [], []>} : vector<2x64xbf16>, vector<768x64xbf16>, vector<2x768xf32> -> vector<2x768xf32>
    %c0_4 = arith.constant 0 : index
    %c0_5 = arith.constant 0 : index
    %11 = vector.load %arg2[%c0_4, %c0_5] : memref<1x768xf32, #tpu.memory_space<vmem>>, vector<1x768xf32>
    %12 = vector.broadcast %11 : vector<1x768xf32> to vector<2x768xf32>
    %13 = arith.addf %10, %12 : vector<2x768xf32>
    %c0_6 = arith.constant 0 : index
    %c0_7 = arith.constant 0 : index
    %14 = vector.load %arg3[%c0_6, %c0_7] : memref<2x768xf32, #tpu.memory_space<vmem>>, vector<2x768xf32>
    tpu.vector_store %arg3[%c0_6, %c0_7], %13 {strides = array<i32>} : memref<2x768xf32, #tpu.memory_space<vmem>>, vector<2x768xf32>,
    return
  }
}

</mosaic_0001>

<llo_original>
// kernel: tpu_custom_call.1
$region0: #{tpu_custom_call.1}
  #allocation0 [shape = 'u32[]', space=smem, size = 0x4, offset = 0x4, fixed_abs, tag = 'smem constant byte address 0x4 - core index']
  #allocation1 [shape = 'u32[144,128]{1,0:T(1,128)}', space=vmem, size = 0x12000, scoped, tag = 'internal scratch']
  %s0 = inlined_call_operand.vmem [shape: f32[2,64], index: 0, kind: input, shape index: {}]
  %s1 = inlined_call_operand.vmem [shape: f32[768,64], index: 1, kind: input, shape index: {}]
  %s2 = inlined_call_operand.vmem [shape: f32[1,768], index: 2, kind: input, shape index: {}]
  %s3 = inlined_call_operand.hbm [shape: f32[2,768], index: 3, kind: output, shape index: {}]
  %s4 = sld [smem:[#allocation0]]
  $region22: #{tpu_custom_call.1} parent=0
    _
  %s6 = ssub.s32 1, %s4
  %s7 = scalar_select 0, %s6, %s4
  $region1: #{tpu_custom_call.1} parent=0
    #allocation2 [shape = 'u8[6144]{0}', space=vmem, size = 0x1800, scoped, tag = 'output window, operand 0, single buffered']
    #allocation3 [shape = 's32[1]{0}', space=sflag, size = 0x4, scoped, tag = 'scoped memory for tpu_custom_call.1']
    %8 = vsyncpa [#allocation3], 0
    // Predicated region
    $region2: #{tpu_custom_call.1} parent=1 // pred_check
      _
    $region3: #{tpu_custom_call.1} parent=1 // pred_check_branch
      %10 = sbr.rel (0) target = $region5
    $region4: #{tpu_custom_call.1} parent=1 // pred_region
      _
    $region5: #{tpu_custom_call.1} parent=1 // pred_fallthru
      _
    // Predicated region
    $region6: #{tpu_custom_call.1} parent=1 // pred_check
      _
    $region7: #{tpu_custom_call.1} parent=1 // pred_check_branch
      %12 = sbr.rel (0) target = $region9
    $region8: #{tpu_custom_call.1} parent=1 // pred_region
      _
    $region9: #{tpu_custom_call.1} parent=1 // pred_fallthru
      _
    // Predicated region
    $region10: #{tpu_custom_call.1} parent=1 // pred_check
      _
    $region11: #{tpu_custom_call.1} parent=1 // pred_check_branch
      %14 = sbr.rel (0) target = $region13
    $region12: #{tpu_custom_call.1} parent=1 // pred_region
      _
    $region13: #{tpu_custom_call.1} parent=1 // pred_fallthru
      _
    %v16 = vld [vmem:[%s0] sm:$0x3]
    %v17 = vxor.u32 %v16, 2147483648
    %v18 = vmul.f32 %v17, 1.442695
    %v19 = vpow.pop %v18
    %v20 = vadd.f32 %v19, 1.0
    %v21 = vrcp.pop %v20
    %v22 = vmul.f32 1.0, %v21
    %v23 = vmul.f32 %v16, %v22
    %v24 = vpack.c.bf16 %v23, %v23
    %v25 = vld [vmem:[%s1] sm:$0xff]
    %v26 = vld [vmem:[%s1 + $0x8] sm:$0xff]
    %v27 = vld [vmem:[%s1 + $0x10] sm:$0xff]
    %v28 = vld [vmem:[%s1 + $0x18] sm:$0xff]
    %v29 = vld [vmem:[%s1 + $0x20] sm:$0xff]
    %v30 = vld [vmem:[%s1 + $0x28] sm:$0xff]
    %v31 = vld [vmem:[%s1 + $0x30] sm:$0xff]
    %v32 = vld [vmem:[%s1 + $0x38] sm:$0xff]
    %v33 = vld [vmem:[%s1 + $0x40] sm:$0xff]
    %v34 = vld [vmem:[%s1 + $0x48] sm:$0xff]
    %v35 = vld [vmem:[%s1 + $0x50] sm:$0xff]
    %v36 = vld [vmem:[%s1 + $0x58] sm:$0xff]
    %v37 = vld [vmem:[%s1 + $0x60] sm:$0xff]
    %v38 = vld [vmem:[%s1 + $0x68] sm:$0xff]
    %v39 = vld [vmem:[%s1 + $0x70] sm:$0xff]
    %v40 = vld [vmem:[%s1 + $0x78] sm:$0xff]
    %v41 = vld [vmem:[%s1 + $0x80] sm:$0xff]
    %v42 = vld [vmem:[%s1 + $0x88] sm:$0xff]
    %v43 = vld [vmem:[%s1 + $0x90] sm:$0xff]
    %v44 = vld [vmem:[%s1 + $0x98] sm:$0xff]
    %v45 = vld [vmem:[%s1 + $0xa0] sm:$0xff]
    %v46 = vld [vmem:[%s1 + $0xa8] sm:$0xff]
    %v47 = vld [vmem:[%s1 + $0xb0] sm:$0xff]
    %v48 = vld [vmem:[%s1 + $0xb8] sm:$0xff]
    %v49 = vld [vmem:[%s1 + $0xc0] sm:$0xff]
    %v50 = vld [vmem:[%s1 + $0xc8] sm:$0xff]
    %v51 = vld [vmem:[%s1 + $0xd0] sm:$0xff]
    %v52 = vld [vmem:[%s1 + $0xd8] sm:$0xff]
    %v53 = vld [vmem:[%s1 + $0xe0] sm:$0xff]
    %v54 = vld [vmem:[%s1 + $0xe8] sm:$0xff]
    %v55 = vld [vmem:[%s1 + $0xf0] sm:$0xff]
    %v56 = vld [vmem:[%s1 + $0xf8] sm:$0xff]
    %v57 = vld [vmem:[%s1 + $0x100] sm:$0xff]
    %v58 = vld [vmem:[%s1 + $0x108] sm:$0xff]
    %v59 = vld [vmem:[%s1 + $0x110] sm:$0xff]
    %v60 = vld [vmem:[%s1 + $0x118] sm:$0xff]
    %v61 = vld [vmem:[%s1 + $0x120] sm:$0xff]
    %v62 = vld [vmem:[%s1 + $0x128] sm:$0xff]
    %v63 = vld [vmem:[%s1 + $0x130] sm:$0xff]
    %v64 = vld [vmem:[%s1 + $0x138] sm:$0xff]
    %v65 = vld [vmem:[%s1 + $0x140] sm:$0xff]
    %v66 = vld [vmem:[%s1 + $0x148] sm:$0xff]
    %v67 = vld [vmem:[%s1 + $0x150] sm:$0xff]
    %v68 = vld [vmem:[%s1 + $0x158] sm:$0xff]
    %v69 = vld [vmem:[%s1 + $0x160] sm:$0xff]
    %v70 = vld [vmem:[%s1 + $0x168] sm:$0xff]
    %v71 = vld [vmem:[%s1 + $0x170] sm:$0xff]
    %v72 = vld [vmem:[%s1 + $0x178] sm:$0xff]
    %v73 = vld [vmem:[%s1 + $0x180] sm:$0xff]
    %v74 = vld [vmem:[%s1 + $0x188] sm:$0xff]
    %v75 = vld [vmem:[%s1 + $0x190] sm:$0xff]
    %v76 = vld [vmem:[%s1 + $0x198] sm:$0xff]
    %v77 = vld [vmem:[%s1 + $0x1a0] sm:$0xff]
    %v78 = vld [vmem:[%s1 + $0x1a8] sm:$0xff]
    %v79 = vld [vmem:[%s1 + $0x1b0] sm:$0xff]
    %v80 = vld [vmem:[%s1 + $0x1b8] sm:$0xff]
    %v81 = vld [vmem:[%s1 + $0x1c0] sm:$0xff]
    %v82 = vld [vmem:[%s1 + $0x1c8] sm:$0xff]
    %v83 = vld [vmem:[%s1 + $0x1d0] sm:$0xff]
    %v84 = vld [vmem:[%s1 + $0x1d8] sm:$0xff]
    %v85 = vld [vmem:[%s1 + $0x1e0] sm:$0xff]
    %v86 = vld [vmem:[%s1 + $0x1e8] sm:$0xff]
    %v87 = vld [vmem:[%s1 + $0x1f0] sm:$0xff]
    %v88 = vld [vmem:[%s1 + $0x1f8] sm:$0xff]
    %v89 = vld [vmem:[%s1 + $0x200] sm:$0xff]
    %v90 = vld [vmem:[%s1 + $0x208] sm:$0xff]
    %v91 = vld [vmem:[%s1 + $0x210] sm:$0xff]
    %v92 = vld [vmem:[%s1 + $0x218] sm:$0xff]
    %v93 = vld [vmem:[%s1 + $0x220] sm:$0xff]
    %v94 = vld [vmem:[%s1 + $0x228] sm:$0xff]
    %v95 = vld [vmem:[%s1 + $0x230] sm:$0xff]
    %v96 = vld [vmem:[%s1 + $0x238] sm:$0xff]
    %v97 = vld [vmem:[%s1 + $0x240] sm:$0xff]
    %v98 = vld [vmem:[%s1 + $0x248] sm:$0xff]
    %v99 = vld [vmem:[%s1 + $0x250] sm:$0xff]
    %v100 = vld [vmem:[%s1 + $0x258] sm:$0xff]
    %v101 = vld [vmem:[%s1 + $0x260] sm:$0xff]
    %v102 = vld [vmem:[%s1 + $0x268] sm:$0xff]
    %v103 = vld [vmem:[%s1 + $0x270] sm:$0xff]
    %v104 = vld [vmem:[%s1 + $0x278] sm:$0xff]
    %v105 = vld [vmem:[%s1 + $0x280] sm:$0xff]
    %v106 = vld [vmem:[%s1 + $0x288] sm:$0xff]
    %v107 = vld [vmem:[%s1 + $0x290] sm:$0xff]
    %v108 = vld [vmem:[%s1 + $0x298] sm:$0xff]
    %v109 = vld [vmem:[%s1 + $0x2a0] sm:$0xff]
    %v110 = vld [vmem:[%s1 + $0x2a8] sm:$0xff]
    %v111 = vld [vmem:[%s1 + $0x2b0] sm:$0xff]
    %v112 = vld [vmem:[%s1 + $0x2b8] sm:$0xff]
    %v113 = vld [vmem:[%s1 + $0x2c0] sm:$0xff]
    %v114 = vld [vmem:[%s1 + $0x2c8] sm:$0xff]
    %v115 = vld [vmem:[%s1 + $0x2d0] sm:$0xff]
    %v116 = vld [vmem:[%s1 + $0x2d8] sm:$0xff]
    %v117 = vld [vmem:[%s1 + $0x2e0] sm:$0xff]
    %v118 = vld [vmem:[%s1 + $0x2e8] sm:$0xff]
    %v119 = vld [vmem:[%s1 + $0x2f0] sm:$0xff]
    %v120 = vld [vmem:[%s1 + $0x2f8] sm:$0xff]
    %v121 = vpack.c.bf16 %v26, %v25
    %v122 = vpack.c.bf16 %v28, %v27
    %v123 = vpack.c.bf16 %v30, %v29
    %v124 = vpack.c.bf16 %v32, %v31
    %v125 = vpack.c.bf16 %v34, %v33
    %v126 = vpack.c.bf16 %v36, %v35
    %v127 = vpack.c.bf16 %v38, %v37
    %v128 = vpack.c.bf16 %v40, %v39
    %v129 = vpack.c.bf16 %v42, %v41
    %v130 = vpack.c.bf16 %v44, %v43
    %v131 = vpack.c.bf16 %v46, %v45
    %v132 = vpack.c.bf16 %v48, %v47
    %v133 = vpack.c.bf16 %v50, %v49
    %v134 = vpack.c.bf16 %v52, %v51
    %v135 = vpack.c.bf16 %v54, %v53
    %v136 = vpack.c.bf16 %v56, %v55
    %v137 = vpack.c.bf16 %v58, %v57
    %v138 = vpack.c.bf16 %v60, %v59
    %v139 = vpack.c.bf16 %v62, %v61
    %v140 = vpack.c.bf16 %v64, %v63
    %v141 = vpack.c.bf16 %v66, %v65
    %v142 = vpack.c.bf16 %v68, %v67
    %v143 = vpack.c.bf16 %v70, %v69
    %v144 = vpack.c.bf16 %v72, %v71
    %v145 = vpack.c.bf16 %v74, %v73
    %v146 = vpack.c.bf16 %v76, %v75
    %v147 = vpack.c.bf16 %v78, %v77
    %v148 = vpack.c.bf16 %v80, %v79
    %v149 = vpack.c.bf16 %v82, %v81
    %v150 = vpack.c.bf16 %v84, %v83
    %v151 = vpack.c.bf16 %v86, %v85
    %v152 = vpack.c.bf16 %v88, %v87
    %v153 = vpack.c.bf16 %v90, %v89
    %v154 = vpack.c.bf16 %v92, %v91
    %v155 = vpack.c.bf16 %v94, %v93
    %v156 = vpack.c.bf16 %v96, %v95
    %v157 = vpack.c.bf16 %v98, %v97
    %v158 = vpack.c.bf16 %v100, %v99
    %v159 = vpack.c.bf16 %v102, %v101
    %v160 = vpack.c.bf16 %v104, %v103
    %v161 = vpack.c.bf16 %v106, %v105
    %v162 = vpack.c.bf16 %v108, %v107
    %v163 = vpack.c.bf16 %v110, %v109
    %v164 = vpack.c.bf16 %v112, %v111
    %v165 = vpack.c.bf16 %v114, %v113
    %v166 = vpack.c.bf16 %v116, %v115
    %v167 = vpack.c.bf16 %v118, %v117
    %v168 = vpack.c.bf16 %v120, %v119
    %v169 = vld [vmem:[%s2] sm:$0x3f]
    %v171 = vlaneseq
    %v172 = vshrl.u32 %v171, 7
    %v173 = vsub.s32 0, %v172
    %v174 = vrot.slane %v169, %v173
    %v175 = vlaneseq
    %v176 = vshrl.u32 %v175, 7
    %v177 = vsub.s32 1, %v176
    %v178 = vrot.slane %v169, %v177
    %v179 = vlaneseq
    %v180 = vshrl.u32 %v179, 7
    %v181 = vsub.s32 2, %v180
    %v182 = vrot.slane %v169, %v181
    %v183 = vlaneseq
    %v184 = vshrl.u32 %v183, 7
    %v185 = vsub.s32 3, %v184
    %v186 = vrot.slane %v169, %v185
    %v187 = vlaneseq
    %v188 = vshrl.u32 %v187, 7
    %v189 = vsub.s32 4, %v188
    %v190 = vrot.slane %v169, %v189
    %v191 = vlaneseq
    %v192 = vshrl.u32 %v191, 7
    %v193 = vsub.s32 5, %v192
    %v194 = vrot.slane %v169, %v193
    %vm201 = vcmask 523264
    %v203 = vsel %vm201, %v24, 0
    %v206 = vsel %vm201, %v121, 0
    %v209 = vsel %vm201, %v122, 0
    %v212 = vsel %vm201, %v123, 0
    %v215 = vsel %vm201, %v124, 0
    %v218 = vsel %vm201, %v125, 0
    %v221 = vsel %vm201, %v126, 0
    %v224 = vsel %vm201, %v127, 0
    %v227 = vsel %vm201, %v128, 0
    %v230 = vsel %vm201, %v129, 0
    %v233 = vsel %vm201, %v130, 0
    %v236 = vsel %vm201, %v131, 0
    %v239 = vsel %vm201, %v132, 0
    %v242 = vsel %vm201, %v133, 0
    %v245 = vsel %vm201, %v134, 0
    %v248 = vsel %vm201, %v135, 0
    %v251 = vsel %vm201, %v136, 0
    %v254 = vsel %vm201, %v137, 0
    %v257 = vsel %vm201, %v138, 0
    %v260 = vsel %vm201, %v139, 0
    %v263 = vsel %vm201, %v140, 0
    %v266 = vsel %vm201, %v141, 0
    %v269 = vsel %vm201, %v142, 0
    %v272 = vsel %vm201, %v143, 0
    %v275 = vsel %vm201, %v144, 0
    %v278 = vsel %vm201, %v145, 0
    %v281 = vsel %vm201, %v146, 0
    %v284 = vsel %vm201, %v147, 0
    %v287 = vsel %vm201, %v148, 0
    %v290 = vsel %vm201, %v149, 0
    %v293 = vsel %vm201, %v150, 0
    %v296 = vsel %vm201, %v151, 0
    %v299 = vsel %vm201, %v152, 0
    %v302 = vsel %vm201, %v153, 0
    %v305 = vsel %vm201, %v154, 0
    %v308 = vsel %vm201, %v155, 0
    %v311 = vsel %vm201, %v156, 0
    %v314 = vsel %vm201, %v157, 0
    %v317 = vsel %vm201, %v158, 0
    %v320 = vsel %vm201, %v159, 0
    %v323 = vsel %vm201, %v160, 0
    %v326 = vsel %vm201, %v161, 0
    %v329 = vsel %vm201, %v162, 0
    %v332 = vsel %vm201, %v163, 0
    %v335 = vsel %vm201, %v164, 0
    %v338 = vsel %vm201, %v165, 0
    %v341 = vsel %vm201, %v166, 0
    %v344 = vsel %vm201, %v167, 0
    %v347 = vsel %vm201, %v168, 0
    %349 = vmatprep.subr.bf16.mxu0 0
    %350 = vmatpush1.bf16.xpose.msra.mxu0 %v206
    %351 = vmatprep.subr.bf16.mxu0 0
    %352 = vmatpush1.bf16.xpose.msra.mxu0 %v209
    %353 = vmatprep.subr.bf16.mxu0 0
    %354 = vmatpush1.bf16.xpose.msra.mxu0 %v212
    %355 = vmatprep.subr.bf16.mxu0 0
    %356 = vmatpush1.bf16.xpose.msra.mxu0 %v215
    %357 = vmatprep.subr.bf16.mxu0 0
    %358 = vmatpush1.bf16.xpose.msra.mxu0 %v218
    %359 = vmatprep.subr.bf16.mxu0 0
    %360 = vmatpush1.bf16.xpose.msra.mxu0 %v221
    %361 = vmatprep.subr.bf16.mxu0 0
    %362 = vmatpush1.bf16.xpose.msra.mxu0 %v224
    %363 = vmatprep.subr.bf16.mxu0 0
    %364 = vmatpush1.bf16.xpose.msra.mxu0 %v227
    %365 = vmatprep.subr.bf16.mxu0 0
    %366 = vmatpush1.bf16.xpose.msra.mxu0 %v230
    %367 = vmatprep.subr.bf16.mxu0 0
    %368 = vmatpush1.bf16.xpose.msra.mxu0 %v233
    %369 = vmatprep.subr.bf16.mxu0 0
    %370 = vmatpush1.bf16.xpose.msra.mxu0 %v236
    %371 = vmatprep.subr.bf16.mxu0 0
    %372 = vmatpush1.bf16.xpose.msra.mxu0 %v239
    %373 = vmatprep.subr.bf16.mxu0 0
    %374 = vmatpush1.bf16.xpose.msra.mxu0 %v242
    %375 = vmatprep.subr.bf16.mxu0 0
    %376 = vmatpush1.bf16.xpose.msra.mxu0 %v245
    %377 = vmatprep.subr.bf16.mxu0 0
    %378 = vmatpush1.bf16.xpose.msra.mxu0 %v248
    %379 = vmatprep.subr.bf16.mxu0 0
    %380 = vmatpush1.bf16.xpose.msra.mxu0 %v251
    %381 = vmatprep.mubr.bf16.mxu0 0
    %382 = vmatmul.mubr.bf16.gmra.mrb[0].mxu0 %v203
    %v383 = vpop.f32.mrb[0].mxu0
    %v384 = vadd.f32 %v174, %v383
    %v385 = vpop.f32.mrb[0].mxu0
    %v386 = vadd.f32 %v178, %v385
    %v387 = vpop.f32.mrb[0].mxu0
    %v388 = vpop.f32.mrb[0].mxu0
    %389 = vdwg.mxu0
    %390 = vmatprep.subr.bf16.mxu0 0
    %391 = vmatpush1.bf16.xpose.msra.mxu0 %v254
    %392 = vmatprep.subr.bf16.mxu0 0
    %393 = vmatpush1.bf16.xpose.msra.mxu0 %v257
    %394 = vmatprep.subr.bf16.mxu0 0
    %395 = vmatpush1.bf16.xpose.msra.mxu0 %v260
    %396 = vmatprep.subr.bf16.mxu0 0
    %397 = vmatpush1.bf16.xpose.msra.mxu0 %v263
    %398 = vmatprep.subr.bf16.mxu0 0
    %399 = vmatpush1.bf16.xpose.msra.mxu0 %v266
    %400 = vmatprep.subr.bf16.mxu0 0
    %401 = vmatpush1.bf16.xpose.msra.mxu0 %v269
    %402 = vmatprep.subr.bf16.mxu0 0
    %403 = vmatpush1.bf16.xpose.msra.mxu0 %v272
    %404 = vmatprep.subr.bf16.mxu0 0
    %405 = vmatpush1.bf16.xpose.msra.mxu0 %v275
    %406 = vmatprep.subr.bf16.mxu0 0
    %407 = vmatpush1.bf16.xpose.msra.mxu0 %v278
    %408 = vmatprep.subr.bf16.mxu0 0
    %409 = vmatpush1.bf16.xpose.msra.mxu0 %v281
    %410 = vmatprep.subr.bf16.mxu0 0
    %411 = vmatpush1.bf16.xpose.msra.mxu0 %v284
    %412 = vmatprep.subr.bf16.mxu0 0
    %413 = vmatpush1.bf16.xpose.msra.mxu0 %v287
    %414 = vmatprep.subr.bf16.mxu0 0
    %415 = vmatpush1.bf16.xpose.msra.mxu0 %v290
    %416 = vmatprep.subr.bf16.mxu0 0
    %417 = vmatpush1.bf16.xpose.msra.mxu0 %v293
    %418 = vmatprep.subr.bf16.mxu0 0
    %419 = vmatpush1.bf16.xpose.msra.mxu0 %v296
    %420 = vmatprep.subr.bf16.mxu0 0
    %421 = vmatpush1.bf16.xpose.msra.mxu0 %v299
    %422 = vmatprep.mubr.bf16.mxu0 0
    %423 = vmatmul.mubr.bf16.gmra.mrb[0].mxu0 %v203
    %v424 = vpop.f32.mrb[0].mxu0
    %v425 = vadd.f32 %v182, %v424
    %v426 = vpop.f32.mrb[0].mxu0
    %v427 = vadd.f32 %v186, %v426
    %v428 = vpop.f32.mrb[0].mxu0
    %v429 = vpop.f32.mrb[0].mxu0
    %430 = vdwg.mxu0
    %431 = vmatprep.subr.bf16.mxu0 0
    %432 = vmatpush1.bf16.xpose.msra.mxu0 %v302
    %433 = vmatprep.subr.bf16.mxu0 0
    %434 = vmatpush1.bf16.xpose.msra.mxu0 %v305
    %435 = vmatprep.subr.bf16.mxu0 0
    %436 = vmatpush1.bf16.xpose.msra.mxu0 %v308
    %437 = vmatprep.subr.bf16.mxu0 0
    %438 = vmatpush1.bf16.xpose.msra.mxu0 %v311
    %439 = vmatprep.subr.bf16.mxu0 0
    %440 = vmatpush1.bf16.xpose.msra.mxu0 %v314
    %441 = vmatprep.subr.bf16.mxu0 0
    %442 = vmatpush1.bf16.xpose.msra.mxu0 %v317
    %443 = vmatprep.subr.bf16.mxu0 0
    %444 = vmatpush1.bf16.xpose.msra.mxu0 %v320
    %445 = vmatprep.subr.bf16.mxu0 0
    %446 = vmatpush1.bf16.xpose.msra.mxu0 %v323
    %447 = vmatprep.subr.bf16.mxu0 0
    %448 = vmatpush1.bf16.xpose.msra.mxu0 %v326
    %449 = vmatprep.subr.bf16.mxu0 0
    %450 = vmatpush1.bf16.xpose.msra.mxu0 %v329
    %451 = vmatprep.subr.bf16.mxu0 0
    %452 = vmatpush1.bf16.xpose.msra.mxu0 %v332
    %453 = vmatprep.subr.bf16.mxu0 0
    %454 = vmatpush1.bf16.xpose.msra.mxu0 %v335
    %455 = vmatprep.subr.bf16.mxu0 0
    %456 = vmatpush1.bf16.xpose.msra.mxu0 %v338
    %457 = vmatprep.subr.bf16.mxu0 0
    %458 = vmatpush1.bf16.xpose.msra.mxu0 %v341
    %459 = vmatprep.subr.bf16.mxu0 0
    %460 = vmatpush1.bf16.xpose.msra.mxu0 %v344
    %461 = vmatprep.subr.bf16.mxu0 0
    %462 = vmatpush1.bf16.xpose.msra.mxu0 %v347
    %463 = vmatprep.mubr.bf16.mxu0 0
    %464 = vmatmul.mubr.bf16.gmra.mrb[0].mxu0 %v203
    %v465 = vpop.f32.mrb[0].mxu0
    %v466 = vadd.f32 %v190, %v465
    %v467 = vpop.f32.mrb[0].mxu0
    %v468 = vadd.f32 %v194, %v467
    %v469 = vpop.f32.mrb[0].mxu0
    %v470 = vpop.f32.mrb[0].mxu0
    %471 = vdwg.mxu0
    %v478 = vcombine.low %v384, %v386
    %v479 = vcombine.low %v425, %v427
    %v481 = vunpack.c.l.s4 1983009808
    %v482 = vunpack.c.0.s8 %v481
    %v483 = vlaneseq
    %v484 = vshrl.u32 %v483, 7
    %v485 = vsub.s32 %v482, %v484
    %v486 = vrot.slane %v478, %v485
    %v488 = vunpack.c.l.s4 1983009808
    %v489 = vunpack.c.0.s8 %v488
    %v490 = vlaneseq
    %v491 = vshrl.u32 %v490, 7
    %v492 = vsub.s32 %v489, %v491
    %v493 = vrot.slane %v479, %v492
    %v494 = vcombine.low %v486, %v493
    %v495 = vcombine.low %v466, %v468
    %v497 = vunpack.c.l.s4 1983009808
    %v498 = vunpack.c.0.s8 %v497
    %v499 = vlaneseq
    %v500 = vshrl.u32 %v499, 7
    %v501 = vsub.s32 %v498, %v500
    %v502 = vrot.slane %v495, %v501
    %505 = vst [vmem:[#allocation2] sm:$0xff] %v494
    %506 = vst [vmem:[#allocation2 + $0x8] sm:$0xf] %v502
    // Predicated region
    $region14: #{tpu_custom_call.1} parent=1 // pred_check
      _
    $region15: #{tpu_custom_call.1} parent=1 // pred_check_branch
      %508 = sbr.rel (0) target = $region17
    $region16: #{tpu_custom_call.1} parent=1 // pred_region
      %s510 = ssub.s32 192, 192
      %511 = vsyncadd [#allocation3], %s510
      %s513 = sshll.u32 [#allocation2], 4
      %s514 = int_to_ptr.vmem [resolvable:$true] %s513
      %516 = dma.vmem_to_hbm [thread:$0]  %s514, 192, %s3, [#allocation3]
    $region17: #{tpu_custom_call.1} parent=1 // pred_fallthru
      _
    // Predicated region
    $region18: #{tpu_custom_call.1} parent=1 // pred_check
      _
    $region19: #{tpu_custom_call.1} parent=1 // pred_check_branch
      %518 = sbr.rel (0) target = $region21
    $region20: #{tpu_custom_call.1} parent=1 // pred_region
      %519 = dma.done [#allocation3], 192
    $region21: #{tpu_custom_call.1} parent=1 // pred_fallthru
      _
    %520 = vsyncpa [#allocation3], 1

</llo_original>
